<compile_context>
chip_gen: v7x
topology: tpu7x:2x2x1
jax: 0.10.0
libtpu: 0.0.40
codegen_flags: <defaults>
</compile_context>

<pallas_src>
import functools

import jax
import jax.numpy as jnp
from jax.experimental import pallas as pl
from jax.experimental.pallas import tpu as pltpu

HIDDEN_SIZES = (50, 100, 150, 50)
LANE = 128      # vreg lane width
SUBLANE = 8     # f32 sublane count


def _round_up(x, m):
    return ((x + m - 1) // m) * m


def mlp_kernel(x_ref,
               w1_ref, b1_ref,
               w2_ref, b2_ref,
               w3_ref, b3_ref,
               w4_ref, b4_ref,
               w5_ref, b5_ref,
               o_ref):
    """Full 5-layer forward for one (TILE_B, 128) batch tile.

    Weights/biases use constant index_maps, so they are DMA'd once and stay
    resident in VMEM across all batch tiles; activations live in vregs/VMEM.
    """
    h = x_ref[...]  # f32 (TILE_B, 128)

    def layer(h, w_ref, b_ref, relu):
        # bf16 MXU matmul with f32 accumulation; bias add + ReLU on the VPU.
        acc = jnp.dot(h.astype(w_ref.dtype), w_ref[...],
                      preferred_element_type=jnp.float32) + b_ref[...]
        return jnp.maximum(acc, 0.0) if relu else acc

    h = layer(h, w1_ref, b1_ref, relu=True)
    h = layer(h, w2_ref, b2_ref, relu=True)
    h = layer(h, w3_ref, b3_ref, relu=True)
    h = layer(h, w4_ref, b4_ref, relu=True)
    h = layer(h, w5_ref, b5_ref, relu=False)

    o_ref[...] = h.astype(o_ref.dtype)  # lane-dense (TILE_B, 128) store


def init_params(key, input_size, output_size):
    """Logical (unpadded) f32 params mimicking nn.Linear's U(-1/sqrt(fan_in), .).

    Weights are stored (in, out), i.e. transposed from PyTorch's (out, in), so
    the kernel computes x @ W + b (== x @ W_torch.T + b).
    """
    sizes = (input_size,) + HIDDEN_SIZES + (output_size,)
    params = []
    for i in range(5):
        fan_in, fan_out = sizes[i], sizes[i + 1]
        key, kw, kb = jax.random.split(key, 3)
        bound = 1.0 / jnp.sqrt(jnp.float32(fan_in))
        w = jax.random.uniform(kw, (fan_in, fan_out), jnp.float32, -bound, bound)
        b = jax.random.uniform(kb, (fan_out,), jnp.float32, -bound, bound)
        params.append((w, b))
    return params


def _pad_params(params, weight_dtype=jnp.bfloat16):
    """Zero-pad each layer to 128-lane-aligned widths; weights -> bf16, biases f32."""
    padded = []
    for w, b in params:
        fi, fo = w.shape
        fi_p, fo_p = _round_up(fi, LANE), _round_up(fo, LANE)
        w_p = jnp.zeros((fi_p, fo_p), weight_dtype).at[:fi, :fo].set(
            w.astype(weight_dtype))
        b_p = jnp.zeros((1, fo_p), jnp.float32).at[:, :fo].set(b[None, :])
        padded.append((w_p, b_p))
    return padded


def simplenet_forward(x, params, *, tile_b=1024):
    """x: (B, input_size) f32. params: logical f32 [(W_in_out, b), ...] x5."""
    B, d_in = x.shape
    out_size = params[-1][0].shape[1]

    padded = _pad_params(params)
    d_in_p = padded[0][0].shape[0]
    d_out_p = padded[-1][0].shape[1]

    # Batch tile: sublane-aligned, no larger than the (padded) batch itself.
    tb = _round_up(min(tile_b, _round_up(B, SUBLANE)), SUBLANE)
    b_pad = _round_up(B, tb)

    # Zero-pad batch rows and input lanes (padded rows/lanes are sliced away).
    x_p = jnp.zeros((b_pad, d_in_p), x.dtype).at[:B, :d_in].set(x)

    args = [x_p]
    in_specs = [pl.BlockSpec((tb, d_in_p), lambda i: (i, 0))]
    for (w, b) in padded:
        args.append(w)
        in_specs.append(pl.BlockSpec(w.shape, lambda i: (0, 0)))  # VMEM-resident
        args.append(b)
        in_specs.append(pl.BlockSpec(b.shape, lambda i: (0, 0)))  # VMEM-resident

    out_p = pl.pallas_call(
        mlp_kernel,
        out_shape=jax.ShapeDtypeStruct((b_pad, d_out_p), jnp.float32),
        grid=(b_pad // tb,),
        in_specs=in_specs,
        out_specs=pl.BlockSpec((tb, d_out_p), lambda i: (i, 0)),
        compiler_params=pltpu.CompilerParams(
            # Batch tiles are independent -> megacore-shardable on v7x.
            dimension_semantics=("parallel",),
            # Plenty of headroom for the largest batch tiles; actual use is a
            # few MiB, well under physical VMEM on v5e/v6e (128 MiB) and
            # v7x (64 MiB).
            vmem_limit_bytes=64 * 1024 * 1024,
        ),
    )(*args)

    # Slice back to the logical (B, output_size) result.
    return out_p[:B, :out_size]


def reference_forward(x, params):
    """Pure-JAX reference mirroring the kernel's precision (bf16 dot inputs,
    f32 accumulation), on the unpadded logical shapes."""
    h = x
    for i, (w, b) in enumerate(params):
        h = jnp.dot(h.astype(jnp.bfloat16), w.astype(jnp.bfloat16),
                    preferred_element_type=jnp.float32) + b[None, :]
        if i < len(params) - 1:
            h = jnp.maximum(h, 0.0)
    return h


if __name__ == "__main__":
    key = jax.random.PRNGKey(0)
    batch, input_size, output_size = 16, 32, 10

    kx, kp = jax.random.split(key)
    x = jax.random.normal(kx, (batch, input_size), jnp.float32)
    params = init_params(kp, input_size, output_size)

    fwd = jax.jit(functools.partial(simplenet_forward, tile_b=1024))
    out = fwd(x, params)
    out = jax.block_until_ready(out)

    ref = reference_forward(x, params)
    assert out.shape == (batch, output_size)
    max_err = float(jnp.max(jnp.abs(out - ref)))
    assert jnp.allclose(out, ref, atol=2e-3, rtol=2e-3), (
        f"mismatch vs reference, max abs err = {max_err}")

    print("KERNEL_OK")
</pallas_src>

<mosaic_0001>
module attributes {stable_mosaic.version = 11 : i64} {
  func.func @mlp_kernel(%arg0: i32, %arg1: memref<16x128xf32, #tpu.memory_space<vmem>>, %arg2: memref<128x128xbf16, #tpu.memory_space<vmem>>, %arg3: memref<1x128xf32, #tpu.memory_space<vmem>>, %arg4: memref<128x128xbf16, #tpu.memory_space<vmem>>, %arg5: memref<1x128xf32, #tpu.memory_space<vmem>>, %arg6: memref<128x256xbf16, #tpu.memory_space<vmem>>, %arg7: memref<1x256xf32, #tpu.memory_space<vmem>>, %arg8: memref<256x128xbf16, #tpu.memory_space<vmem>>, %arg9: memref<1x128xf32, #tpu.memory_space<vmem>>, %arg10: memref<128x128xbf16, #tpu.memory_space<vmem>>, %arg11: memref<1x128xf32, #tpu.memory_space<vmem>>, %arg12: memref<16x128xf32, #tpu.memory_space<vmem>>) attributes {dimension_semantics = [#tpu.dimension_semantics<parallel>], iteration_bounds = array<i64: 1>, scalar_prefetch = 0 : i64, scratch_operands = 0 : i64, tpu.core_type = #tpu.core_type<tc>, window_params = [{transform_indices = @transform_0, window_bounds = array<i64: 16, 128>}, {pipeline_mode = #tpu.pipeline_mode<synchronous>, transform_indices = @transform_1, window_bounds = array<i64: 128, 128>}, {pipeline_mode = #tpu.pipeline_mode<synchronous>, transform_indices = @transform_2, window_bounds = array<i64: 1, 128>}, {pipeline_mode = #tpu.pipeline_mode<synchronous>, transform_indices = @transform_3, window_bounds = array<i64: 128, 128>}, {pipeline_mode = #tpu.pipeline_mode<synchronous>, transform_indices = @transform_4, window_bounds = array<i64: 1, 128>}, {pipeline_mode = #tpu.pipeline_mode<synchronous>, transform_indices = @transform_5, window_bounds = array<i64: 128, 256>}, {pipeline_mode = #tpu.pipeline_mode<synchronous>, transform_indices = @transform_6, window_bounds = array<i64: 1, 256>}, {pipeline_mode = #tpu.pipeline_mode<synchronous>, transform_indices = @transform_7, window_bounds = array<i64: 256, 128>}, {pipeline_mode = #tpu.pipeline_mode<synchronous>, transform_indices = @transform_8, window_bounds = array<i64: 1, 128>}, {pipeline_mode = #tpu.pipeline_mode<synchronous>, transform_indices = @transform_9, window_bounds = array<i64: 128, 128>}, {pipeline_mode = #tpu.pipeline_mode<synchronous>, transform_indices = @transform_10, window_bounds = array<i64: 1, 128>}, {transform_indices = @transform_11, window_bounds = array<i64: 16, 128>}]} {
    %c0 = arith.constant 0 : index
    %c0_0 = arith.constant 0 : index
    %0 = vector.load %arg1[%c0, %c0_0] : memref<16x128xf32, #tpu.memory_space<vmem>>, vector<16x128xf32>
    %1 = arith.truncf %0 : vector<16x128xf32> to vector<16x128xbf16>
    %c0_1 = arith.constant 0 : index
    %c0_2 = arith.constant 0 : index
    %2 = vector.load %arg2[%c0_1, %c0_2] : memref<128x128xbf16, #tpu.memory_space<vmem>>, vector<128x128xbf16>
    %cst = arith.constant dense<0.000000e+00> : vector<16x128xf32>
    %3 = tpu.matmul %1, %2, %cst {dimension_numbers = #tpu.dot_dimension_numbers<[1], [0], [0], [1], [0, 0, 1, 1], [], []>} : vector<16x128xbf16>, vector<128x128xbf16>, vector<16x128xf32> -> vector<16x128xf32>
    %c0_3 = arith.constant 0 : index
    %c0_4 = arith.constant 0 : index
    %4 = vector.load %arg3[%c0_3, %c0_4] : memref<1x128xf32, #tpu.memory_space<vmem>>, vector<1x128xf32>
    %5 = vector.broadcast %4 : vector<1x128xf32> to vector<16x128xf32>
    %6 = arith.addf %3, %5 : vector<16x128xf32>
    %cst_5 = arith.constant 0.000000e+00 : f32
    %7 = vector.broadcast %cst_5 : f32 to vector<16x128xf32>
    %8 = arith.maximumf %6, %7 : vector<16x128xf32>
    %9 = arith.truncf %8 : vector<16x128xf32> to vector<16x128xbf16>
    %c0_6 = arith.constant 0 : index
    %c0_7 = arith.constant 0 : index
    %10 = vector.load %arg4[%c0_6, %c0_7] : memref<128x128xbf16, #tpu.memory_space<vmem>>, vector<128x128xbf16>
    %cst_8 = arith.constant dense<0.000000e+00> : vector<16x128xf32>
    %11 = tpu.matmul %9, %10, %cst_8 {dimension_numbers = #tpu.dot_dimension_numbers<[1], [0], [0], [1], [0, 0, 1, 1], [], []>} : vector<16x128xbf16>, vector<128x128xbf16>, vector<16x128xf32> -> vector<16x128xf32>
    %c0_9 = arith.constant 0 : index
    %c0_10 = arith.constant 0 : index
    %12 = vector.load %arg5[%c0_9, %c0_10] : memref<1x128xf32, #tpu.memory_space<vmem>>, vector<1x128xf32>
    %13 = vector.broadcast %12 : vector<1x128xf32> to vector<16x128xf32>
    %14 = arith.addf %11, %13 : vector<16x128xf32>
    %cst_11 = arith.constant 0.000000e+00 : f32
    %15 = vector.broadcast %cst_11 : f32 to vector<16x128xf32>
    %16 = arith.maximumf %14, %15 : vector<16x128xf32>
    %17 = arith.truncf %16 : vector<16x128xf32> to vector<16x128xbf16>
    %c0_12 = arith.constant 0 : index
    %c0_13 = arith.constant 0 : index
    %18 = vector.load %arg6[%c0_12, %c0_13] : memref<128x256xbf16, #tpu.memory_space<vmem>>, vector<128x256xbf16>
    %cst_14 = arith.constant dense<0.000000e+00> : vector<16x256xf32>
    %19 = tpu.matmul %17, %18, %cst_14 {dimension_numbers = #tpu.dot_dimension_numbers<[1], [0], [0], [1], [0, 0, 1, 1], [], []>} : vector<16x128xbf16>, vector<128x256xbf16>, vector<16x256xf32> -> vector<16x256xf32>
    %c0_15 = arith.constant 0 : index
    %c0_16 = arith.constant 0 : index
    %20 = vector.load %arg7[%c0_15, %c0_16] : memref<1x256xf32, #tpu.memory_space<vmem>>, vector<1x256xf32>
    %21 = vector.broadcast %20 : vector<1x256xf32> to vector<16x256xf32>
    %22 = arith.addf %19, %21 : vector<16x256xf32>
    %cst_17 = arith.constant 0.000000e+00 : f32
    %23 = vector.broadcast %cst_17 : f32 to vector<16x256xf32>
    %24 = arith.maximumf %22, %23 : vector<16x256xf32>
    %25 = arith.truncf %24 : vector<16x256xf32> to vector<16x256xbf16>
    %c0_18 = arith.constant 0 : index
    %c0_19 = arith.constant 0 : index
    %26 = vector.load %arg8[%c0_18, %c0_19] : memref<256x128xbf16, #tpu.memory_space<vmem>>, vector<256x128xbf16>
    %cst_20 = arith.constant dense<0.000000e+00> : vector<16x128xf32>
    %27 = tpu.matmul %25, %26, %cst_20 {dimension_numbers = #tpu.dot_dimension_numbers<[1], [0], [0], [1], [0, 0, 1, 1], [], []>} : vector<16x256xbf16>, vector<256x128xbf16>, vector<16x128xf32> -> vector<16x128xf32>
    %c0_21 = arith.constant 0 : index
    %c0_22 = arith.constant 0 : index
    %28 = vector.load %arg9[%c0_21, %c0_22] : memref<1x128xf32, #tpu.memory_space<vmem>>, vector<1x128xf32>
    %29 = vector.broadcast %28 : vector<1x128xf32> to vector<16x128xf32>
    %30 = arith.addf %27, %29 : vector<16x128xf32>
    %cst_23 = arith.constant 0.000000e+00 : f32
    %31 = vector.broadcast %cst_23 : f32 to vector<16x128xf32>
    %32 = arith.maximumf %30, %31 : vector<16x128xf32>
    %33 = arith.truncf %32 : vector<16x128xf32> to vector<16x128xbf16>
    %c0_24 = arith.constant 0 : index
    %c0_25 = arith.constant 0 : index
    %34 = vector.load %arg10[%c0_24, %c0_25] : memref<128x128xbf16, #tpu.memory_space<vmem>>, vector<128x128xbf16>
    %cst_26 = arith.constant dense<0.000000e+00> : vector<16x128xf32>
    %35 = tpu.matmul %33, %34, %cst_26 {dimension_numbers = #tpu.dot_dimension_numbers<[1], [0], [0], [1], [0, 0, 1, 1], [], []>} : vector<16x128xbf16>, vector<128x128xbf16>, vector<16x128xf32> -> vector<16x128xf32>
    %c0_27 = arith.constant 0 : index
    %c0_28 = arith.constant 0 : index
    %36 = vector.load %arg11[%c0_27, %c0_28] : memref<1x128xf32, #tpu.memory_space<vmem>>, vector<1x128xf32>
    %37 = vector.broadcast %36 : vector<1x128xf32> to vector<16x128xf32>
    %38 = arith.addf %35, %37 : vector<16x128xf32>
    %c0_29 = arith.constant 0 : index
    %c0_30 = arith.constant 0 : index
    %39 = vector.load %arg12[%c0_29, %c0_30] : memref<16x128xf32, #tpu.memory_space<vmem>>, vector<16x128xf32>
    tpu.vector_store %arg12[%c0_29, %c0_30], %38 {strides = array<i32>} : memref<16x128xf32, #tpu.memory_space<vmem>>, vector<16x128xf32>,
    return
  }
  func.func @transform_0(%arg0: i32) -> (i32, i32) {
    %c0_i32 = arith.constant 0 : i32
    %c0_i32_0 = arith.constant 0 : i32
    return %arg0, %c0_i32 : i32, i32
  }
  func.func @transform_1(%arg0: i32) -> (i32, i32) {
    %c0_i32 = arith.constant 0 : i32
    %c0_i32_0 = arith.constant 0 : i32
    %c0_i32_1 = arith.constant 0 : i32
    return %c0_i32, %c0_i32_0 : i32, i32
  }
  func.func @transform_2(%arg0: i32) -> (i32, i32) {
    %c0_i32 = arith.constant 0 : i32
    %c0_i32_0 = arith.constant 0 : i32
    %c0_i32_1 = arith.constant 0 : i32
    return %c0_i32, %c0_i32_0 : i32, i32
  }
  func.func @transform_3(%arg0: i32) -> (i32, i32) {
    %c0_i32 = arith.constant 0 : i32
    %c0_i32_0 = arith.constant 0 : i32
    %c0_i32_1 = arith.constant 0 : i32
    return %c0_i32, %c0_i32_0 : i32, i32
  }
  func.func @transform_4(%arg0: i32) -> (i32, i32) {
    %c0_i32 = arith.constant 0 : i32
    %c0_i32_0 = arith.constant 0 : i32
    %c0_i32_1 = arith.constant 0 : i32
    return %c0_i32, %c0_i32_0 : i32, i32
  }
  func.func @transform_5(%arg0: i32) -> (i32, i32) {
    %c0_i32 = arith.constant 0 : i32
    %c0_i32_0 = arith.constant 0 : i32
    %c0_i32_1 = arith.constant 0 : i32
    return %c0_i32, %c0_i32_0 : i32, i32
  }
  func.func @transform_6(%arg0: i32) -> (i32, i32) {
    %c0_i32 = arith.constant 0 : i32
    %c0_i32_0 = arith.constant 0 : i32
    %c0_i32_1 = arith.constant 0 : i32
    return %c0_i32, %c0_i32_0 : i32, i32
  }
  func.func @transform_7(%arg0: i32) -> (i32, i32) {
    %c0_i32 = arith.constant 0 : i32
    %c0_i32_0 = arith.constant 0 : i32
    %c0_i32_1 = arith.constant 0 : i32
    return %c0_i32, %c0_i32_0 : i32, i32
  }
  func.func @transform_8(%arg0: i32) -> (i32, i32) {
    %c0_i32 = arith.constant 0 : i32
    %c0_i32_0 = arith.constant 0 : i32
    %c0_i32_1 = arith.constant 0 : i32
    return %c0_i32, %c0_i32_0 : i32, i32
  }
  func.func @transform_9(%arg0: i32) -> (i32, i32) {
    %c0_i32 = arith.constant 0 : i32
    %c0_i32_0 = arith.constant 0 : i32
    %c0_i32_1 = arith.constant 0 : i32
    return %c0_i32, %c0_i32_0 : i32, i32
  }
  func.func @transform_10(%arg0: i32) -> (i32, i32) {
    %c0_i32 = arith.constant 0 : i32
    %c0_i32_0 = arith.constant 0 : i32
    %c0_i32_1 = arith.constant 0 : i32
    return %c0_i32, %c0_i32_0 : i32, i32
  }
  func.func @transform_11(%arg0: i32) -> (i32, i32) {
    %c0_i32 = arith.constant 0 : i32
    %c0_i32_0 = arith.constant 0 : i32
    return %arg0, %c0_i32 : i32, i32
  }
}

</mosaic_0001>

<llo_original>
// kernel: simplenet_forward.1
$region0: #{simplenet_forward.1}
  #allocation0 [shape = 'u32[]', space=smem, size = 0x4, offset = 0x4, fixed_abs, tag = 'smem constant byte address 0x4 - core index']
  #allocation1 [shape = 'u32[144,128]{1,0:T(1,128)}', space=vmem, size = 0x12000, scoped, tag = 'internal scratch']
  %s0 = inlined_call_operand.hbm [shape: f32[16,128], index: 0, kind: input, shape index: {}]
  %s1 = inlined_call_operand.hbm [shape: bf16[128,128], index: 1, kind: input, shape index: {}]
  %s2 = inlined_call_operand.hbm [shape: f32[1,128], index: 2, kind: input, shape index: {}]
  %s3 = inlined_call_operand.hbm [shape: bf16[128,128], index: 3, kind: input, shape index: {}]
  %s4 = inlined_call_operand.hbm [shape: f32[1,128], index: 4, kind: input, shape index: {}]
  %s5 = inlined_call_operand.hbm [shape: bf16[128,256], index: 5, kind: input, shape index: {}]
  %s6 = inlined_call_operand.hbm [shape: f32[1,256], index: 6, kind: input, shape index: {}]
  %s7 = inlined_call_operand.hbm [shape: bf16[256,128], index: 7, kind: input, shape index: {}]
  %s8 = inlined_call_operand.hbm [shape: f32[1,128], index: 8, kind: input, shape index: {}]
  %s9 = inlined_call_operand.hbm [shape: bf16[128,128], index: 9, kind: input, shape index: {}]
  %s10 = inlined_call_operand.hbm [shape: f32[1,128], index: 10, kind: input, shape index: {}]
  %s11 = inlined_call_operand.hbm [shape: f32[16,128], index: 11, kind: output, shape index: {}]
  %s12 = sld [smem:[#allocation0]]
  $region98: #{simplenet_forward.1} parent=0
    _
  %s14 = ssub.s32 1, %s12
  %s15 = scalar_select 0, %s14, %s12
  $region1: #{simplenet_forward.1} parent=0
    #allocation2 [shape = 'u8[8192]{0}', space=vmem, size = 0x2000, scoped, tag = 'input window, operand 0, single buffered']
    #allocation3 [shape = 's32[1]{0}', space=sflag, size = 0x4, scoped, tag = 'scoped memory for simplenet_forward.1']
    #allocation4 [shape = 's32[1]{0}', space=sflag, size = 0x4, scoped, tag = 'scoped memory for simplenet_forward.1']
    #allocation5 [shape = 'u8[32768]{0}', space=vmem, size = 0x8000, scoped, tag = 'input window, operand 1, single buffered']
    #allocation6 [shape = 's32[1]{0}', space=sflag, size = 0x4, scoped, tag = 'scoped memory for simplenet_forward.1']
    #allocation7 [shape = 'u8[512]{0}', space=vmem, size = 0x400, scoped, tag = 'input window, operand 2, single buffered']
    #allocation8 [shape = 'u8[32768]{0}', space=vmem, size = 0x8000, scoped, tag = 'input window, operand 3, single buffered']
    #allocation9 [shape = 's32[1]{0}', space=sflag, size = 0x4, scoped, tag = 'scoped memory for simplenet_forward.1']
    #allocation10 [shape = 'u8[512]{0}', space=vmem, size = 0x400, scoped, tag = 'input window, operand 4, single buffered']
    #allocation11 [shape = 'u8[65536]{0}', space=vmem, size = 0x10000, scoped, tag = 'input window, operand 5, single buffered']
    #allocation12 [shape = 's32[1]{0}', space=sflag, size = 0x4, scoped, tag = 'scoped memory for simplenet_forward.1']
    #allocation13 [shape = 'u8[1024]{0}', space=vmem, size = 0x400, scoped, tag = 'input window, operand 6, single buffered']
    #allocation14 [shape = 'u8[65536]{0}', space=vmem, size = 0x10000, scoped, tag = 'input window, operand 7, single buffered']
    #allocation15 [shape = 's32[1]{0}', space=sflag, size = 0x4, scoped, tag = 'scoped memory for simplenet_forward.1']
    #allocation16 [shape = 'u8[512]{0}', space=vmem, size = 0x400, scoped, tag = 'input window, operand 8, single buffered']
    #allocation17 [shape = 'u8[32768]{0}', space=vmem, size = 0x8000, scoped, tag = 'input window, operand 9, single buffered']
    #allocation18 [shape = 's32[1]{0}', space=sflag, size = 0x4, scoped, tag = 'scoped memory for simplenet_forward.1']
    #allocation19 [shape = 'u8[512]{0}', space=vmem, size = 0x400, scoped, tag = 'input window, operand 10, single buffered']
    #allocation20 [shape = 'u8[8192]{0}', space=vmem, size = 0x2000, scoped, tag = 'output window, operand 0, single buffered']
    %16 = vsyncpa [#allocation3], 0
    %17 = vsyncpa [#allocation6], 0
    %18 = vsyncpa [#allocation9], 0
    %19 = vsyncpa [#allocation12], 0
    %20 = vsyncpa [#allocation15], 0
    %21 = vsyncpa [#allocation18], 0
    %22 = vsyncpa [#allocation4], 0
    // Predicated region
    $region2: #{simplenet_forward.1} parent=1 // pred_check
      _
    $region3: #{simplenet_forward.1} parent=1 // pred_check_branch
      %24 = sbr.rel (0) target = $region5
    $region4: #{simplenet_forward.1} parent=1 // pred_region
      %s26 = ssub.s32 256, 256
      %27 = vsyncadd [#allocation3], %s26
      %s28 = sshll.u32 [#allocation2], 4
      %s29 = int_to_ptr.vmem [resolvable:$true] %s28
      %34 = dma.hbm_to_vmem [thread:$0]  %s0, 256, %s29, [#allocation3], 128, 128, 8
    $region5: #{simplenet_forward.1} parent=1 // pred_fallthru
      _
    // Predicated region
    $region6: #{simplenet_forward.1} parent=1 // pred_check
      _
    $region7: #{simplenet_forward.1} parent=1 // pred_check_branch
      %36 = sbr.rel (0) target = $region9
    $region8: #{simplenet_forward.1} parent=1 // pred_region
      %s38 = ssub.s32 1024, 1024
      %39 = vsyncadd [#allocation6], %s38
      %s40 = sshll.u32 [#allocation5], 4
      %s41 = int_to_ptr.vmem [resolvable:$true] %s40
      %46 = dma.hbm_to_vmem [thread:$0]  %s1, 1024, %s41, [#allocation6], 64, 64, 4
    $region9: #{simplenet_forward.1} parent=1 // pred_fallthru
      _
    // Predicated region
    $region10: #{simplenet_forward.1} parent=1 // pred_check
      _
    $region11: #{simplenet_forward.1} parent=1 // pred_check_branch
      %48 = sbr.rel (0) target = $region13
    $region12: #{simplenet_forward.1} parent=1 // pred_region
      %s50 = ssub.s32 16, 16
      %51 = vsyncadd [#allocation6], %s50
      %s53 = sshll.u32 [#allocation7], 4
      %s54 = int_to_ptr.vmem [resolvable:$true] %s53
      %56 = dma.hbm_to_vmem [thread:$0]  %s2, 16, %s54, [#allocation6]
    $region13: #{simplenet_forward.1} parent=1 // pred_fallthru
      _
    // Predicated region
    $region14: #{simplenet_forward.1} parent=1 // pred_check
      _
    $region15: #{simplenet_forward.1} parent=1 // pred_check_branch
      %58 = sbr.rel (0) target = $region17
    $region16: #{simplenet_forward.1} parent=1 // pred_region
      %s60 = ssub.s32 1024, 1024
      %61 = vsyncadd [#allocation9], %s60
      %s62 = sshll.u32 [#allocation8], 4
      %s63 = int_to_ptr.vmem [resolvable:$true] %s62
      %68 = dma.hbm_to_vmem [thread:$0]  %s3, 1024, %s63, [#allocation9], 64, 64, 4
    $region17: #{simplenet_forward.1} parent=1 // pred_fallthru
      _
    // Predicated region
    $region18: #{simplenet_forward.1} parent=1 // pred_check
      _
    $region19: #{simplenet_forward.1} parent=1 // pred_check_branch
      %70 = sbr.rel (0) target = $region21
    $region20: #{simplenet_forward.1} parent=1 // pred_region
      %s72 = ssub.s32 16, 16
      %73 = vsyncadd [#allocation9], %s72
      %s75 = sshll.u32 [#allocation10], 4
      %s76 = int_to_ptr.vmem [resolvable:$true] %s75
      %78 = dma.hbm_to_vmem [thread:$0]  %s4, 16, %s76, [#allocation9]
    $region21: #{simplenet_forward.1} parent=1 // pred_fallthru
      _
    // Predicated region
    $region22: #{simplenet_forward.1} parent=1 // pred_check
      _
    $region23: #{simplenet_forward.1} parent=1 // pred_check_branch
      %80 = sbr.rel (0) target = $region25
    $region24: #{simplenet_forward.1} parent=1 // pred_region
      %s82 = ssub.s32 2048, 2048
      %83 = vsyncadd [#allocation12], %s82
      %s84 = sshll.u32 [#allocation11], 4
      %s85 = int_to_ptr.vmem [resolvable:$true] %s84
      %90 = dma.hbm_to_vmem [thread:$0]  %s5, 2048, %s85, [#allocation12], 128, 128, 8
    $region25: #{simplenet_forward.1} parent=1 // pred_fallthru
      _
    // Predicated region
    $region26: #{simplenet_forward.1} parent=1 // pred_check
      _
    $region27: #{simplenet_forward.1} parent=1 // pred_check_branch
      %92 = sbr.rel (0) target = $region29
    $region28: #{simplenet_forward.1} parent=1 // pred_region
      %s94 = ssub.s32 32, 32
      %95 = vsyncadd [#allocation12], %s94
      %s97 = sshll.u32 [#allocation13], 4
      %s98 = int_to_ptr.vmem [resolvable:$true] %s97
      %100 = dma.hbm_to_vmem [thread:$0]  %s6, 32, %s98, [#allocation12]
    $region29: #{simplenet_forward.1} parent=1 // pred_fallthru
      _
    // Predicated region
    $region30: #{simplenet_forward.1} parent=1 // pred_check
      _
    $region31: #{simplenet_forward.1} parent=1 // pred_check_branch
      %102 = sbr.rel (0) target = $region33
    $region32: #{simplenet_forward.1} parent=1 // pred_region
      %s104 = ssub.s32 2048, 2048
      %105 = vsyncadd [#allocation15], %s104
      %s106 = sshll.u32 [#allocation14], 4
      %s107 = int_to_ptr.vmem [resolvable:$true] %s106
      %112 = dma.hbm_to_vmem [thread:$0]  %s7, 2048, %s107, [#allocation15], 64, 64, 4
    $region33: #{simplenet_forward.1} parent=1 // pred_fallthru
      _
    // Predicated region
    $region34: #{simplenet_forward.1} parent=1 // pred_check
      _
    $region35: #{simplenet_forward.1} parent=1 // pred_check_branch
      %114 = sbr.rel (0) target = $region37
    $region36: #{simplenet_forward.1} parent=1 // pred_region
      %s116 = ssub.s32 16, 16
      %117 = vsyncadd [#allocation15], %s116
      %s119 = sshll.u32 [#allocation16], 4
      %s120 = int_to_ptr.vmem [resolvable:$true] %s119
      %122 = dma.hbm_to_vmem [thread:$0]  %s8, 16, %s120, [#allocation15]
    $region37: #{simplenet_forward.1} parent=1 // pred_fallthru
      _
    // Predicated region
    $region38: #{simplenet_forward.1} parent=1 // pred_check
      _
    $region39: #{simplenet_forward.1} parent=1 // pred_check_branch
      %124 = sbr.rel (0) target = $region41
    $region40: #{simplenet_forward.1} parent=1 // pred_region
      %s126 = ssub.s32 1024, 1024
      %127 = vsyncadd [#allocation18], %s126
      %s128 = sshll.u32 [#allocation17], 4
      %s129 = int_to_ptr.vmem [resolvable:$true] %s128
      %134 = dma.hbm_to_vmem [thread:$0]  %s9, 1024, %s129, [#allocation18], 64, 64, 4
    $region41: #{simplenet_forward.1} parent=1 // pred_fallthru
      _
    // Predicated region
    $region42: #{simplenet_forward.1} parent=1 // pred_check
      _
    $region43: #{simplenet_forward.1} parent=1 // pred_check_branch
      %136 = sbr.rel (0) target = $region45
    $region44: #{simplenet_forward.1} parent=1 // pred_region
      %s138 = ssub.s32 16, 16
      %139 = vsyncadd [#allocation18], %s138
      %s141 = sshll.u32 [#allocation19], 4
      %s142 = int_to_ptr.vmem [resolvable:$true] %s141
      %144 = dma.hbm_to_vmem [thread:$0]  %s10, 16, %s142, [#allocation18]
    $region45: #{simplenet_forward.1} parent=1 // pred_fallthru
      _
    // Predicated region
    $region46: #{simplenet_forward.1} parent=1 // pred_check
      _
    $region47: #{simplenet_forward.1} parent=1 // pred_check_branch
      %146 = sbr.rel (0) target = $region49
    $region48: #{simplenet_forward.1} parent=1 // pred_region
      %147 = dma.done [#allocation3], 256
    $region49: #{simplenet_forward.1} parent=1 // pred_fallthru
      _
    // Predicated region
    $region50: #{simplenet_forward.1} parent=1 // pred_check
      _
    $region51: #{simplenet_forward.1} parent=1 // pred_check_branch
      %149 = sbr.rel (0) target = $region53
    $region52: #{simplenet_forward.1} parent=1 // pred_region
      %150 = dma.done [#allocation6], 1024
    $region53: #{simplenet_forward.1} parent=1 // pred_fallthru
      _
    // Predicated region
    $region54: #{simplenet_forward.1} parent=1 // pred_check
      _
    $region55: #{simplenet_forward.1} parent=1 // pred_check_branch
      %152 = sbr.rel (0) target = $region57
    $region56: #{simplenet_forward.1} parent=1 // pred_region
      %153 = dma.done [#allocation6], 16
    $region57: #{simplenet_forward.1} parent=1 // pred_fallthru
      _
    // Predicated region
    $region58: #{simplenet_forward.1} parent=1 // pred_check
      _
    $region59: #{simplenet_forward.1} parent=1 // pred_check_branch
      %155 = sbr.rel (0) target = $region61
    $region60: #{simplenet_forward.1} parent=1 // pred_region
      %156 = dma.done [#allocation9], 1024
    $region61: #{simplenet_forward.1} parent=1 // pred_fallthru
      _
    // Predicated region
    $region62: #{simplenet_forward.1} parent=1 // pred_check
      _
    $region63: #{simplenet_forward.1} parent=1 // pred_check_branch
      %158 = sbr.rel (0) target = $region65
    $region64: #{simplenet_forward.1} parent=1 // pred_region
      %159 = dma.done [#allocation9], 16
    $region65: #{simplenet_forward.1} parent=1 // pred_fallthru
      _
    // Predicated region
    $region66: #{simplenet_forward.1} parent=1 // pred_check
      _
    $region67: #{simplenet_forward.1} parent=1 // pred_check_branch
      %161 = sbr.rel (0) target = $region69
    $region68: #{simplenet_forward.1} parent=1 // pred_region
      %162 = dma.done [#allocation12], 2048
    $region69: #{simplenet_forward.1} parent=1 // pred_fallthru
      _
    // Predicated region
    $region70: #{simplenet_forward.1} parent=1 // pred_check
      _
    $region71: #{simplenet_forward.1} parent=1 // pred_check_branch
      %164 = sbr.rel (0) target = $region73
    $region72: #{simplenet_forward.1} parent=1 // pred_region
      %165 = dma.done [#allocation12], 32
    $region73: #{simplenet_forward.1} parent=1 // pred_fallthru
      _
    // Predicated region
    $region74: #{simplenet_forward.1} parent=1 // pred_check
      _
    $region75: #{simplenet_forward.1} parent=1 // pred_check_branch
      %167 = sbr.rel (0) target = $region77
    $region76: #{simplenet_forward.1} parent=1 // pred_region
      %168 = dma.done [#allocation15], 2048
    $region77: #{simplenet_forward.1} parent=1 // pred_fallthru
      _
    // Predicated region
    $region78: #{simplenet_forward.1} parent=1 // pred_check
      _
    $region79: #{simplenet_forward.1} parent=1 // pred_check_branch
      %170 = sbr.rel (0) target = $region81
    $region80: #{simplenet_forward.1} parent=1 // pred_region
      %171 = dma.done [#allocation15], 16
    $region81: #{simplenet_forward.1} parent=1 // pred_fallthru
      _
    // Predicated region
    $region82: #{simplenet_forward.1} parent=1 // pred_check
      _
    $region83: #{simplenet_forward.1} parent=1 // pred_check_branch
      %173 = sbr.rel (0) target = $region85
    $region84: #{simplenet_forward.1} parent=1 // pred_region
      %174 = dma.done [#allocation18], 1024
    $region85: #{simplenet_forward.1} parent=1 // pred_fallthru
      _
    // Predicated region
    $region86: #{simplenet_forward.1} parent=1 // pred_check
      _
    $region87: #{simplenet_forward.1} parent=1 // pred_check_branch
      %176 = sbr.rel (0) target = $region89
    $region88: #{simplenet_forward.1} parent=1 // pred_region
      %177 = dma.done [#allocation18], 16
    $region89: #{simplenet_forward.1} parent=1 // pred_fallthru
      _
    %v179 = vld [vmem:[#allocation2] sm:$0xff]
    %v180 = vld [vmem:[#allocation2 + $0x8] sm:$0xff]
    %v181 = vpack.c.bf16 %v180, %v179
    %v182 = vld [vmem:[#allocation5] sm:$0xf]
    %v183 = vld [vmem:[#allocation5 + $0x4] sm:$0xf]
    %v184 = vld [vmem:[#allocation5 + $0x8] sm:$0xf]
    %v185 = vld [vmem:[#allocation5 + $0xc] sm:$0xf]
    %v186 = vld [vmem:[#allocation5 + $0x10] sm:$0xf]
    %v187 = vld [vmem:[#allocation5 + $0x14] sm:$0xf]
    %v188 = vld [vmem:[#allocation5 + $0x18] sm:$0xf]
    %v189 = vld [vmem:[#allocation5 + $0x1c] sm:$0xf]
    %v190 = vld [vmem:[#allocation5 + $0x20] sm:$0xf]
    %v191 = vld [vmem:[#allocation5 + $0x24] sm:$0xf]
    %v192 = vld [vmem:[#allocation5 + $0x28] sm:$0xf]
    %v193 = vld [vmem:[#allocation5 + $0x2c] sm:$0xf]
    %v194 = vld [vmem:[#allocation5 + $0x30] sm:$0xf]
    %v195 = vld [vmem:[#allocation5 + $0x34] sm:$0xf]
    %v196 = vld [vmem:[#allocation5 + $0x38] sm:$0xf]
    %v197 = vld [vmem:[#allocation5 + $0x3c] sm:$0xf]
    %v198 = vld [vmem:[#allocation7] sm:$0x1]
    %v200 = vlaneseq
    %v201 = vshrl.u32 %v200, 7
    %v202 = vsub.s32 0, %v201
    %v203 = vrot.slane %v198, %v202
    %v221 = vunpack.c.l.b16 %v182
    %v222 = vunpack.c.l.b16 %v183
    %v223 = vunpack.c.l.b16 %v184
    %v224 = vunpack.c.l.b16 %v185
    %v225 = vunpack.c.l.b16 %v186
    %v226 = vunpack.c.l.b16 %v187
    %v227 = vunpack.c.l.b16 %v188
    %v228 = vunpack.c.l.b16 %v189
    %v229 = vunpack.c.l.b16 %v190
    %v230 = vunpack.c.l.b16 %v191
    %v231 = vunpack.c.l.b16 %v192
    %v232 = vunpack.c.l.b16 %v193
    %v233 = vunpack.c.l.b16 %v194
    %v234 = vunpack.c.l.b16 %v195
    %v235 = vunpack.c.l.b16 %v196
    %v236 = vunpack.c.l.b16 %v197
    %v237 = vpack.c.b16 %v222, %v221
    %v238 = vpack.c.b16 %v224, %v223
    %v239 = vpack.c.b16 %v226, %v225
    %v240 = vpack.c.b16 %v228, %v227
    %v241 = vpack.c.b16 %v230, %v229
    %v242 = vpack.c.b16 %v232, %v231
    %v243 = vpack.c.b16 %v234, %v233
    %v244 = vpack.c.b16 %v236, %v235
    %253 = vmatprep.subr.bf16.mxu0 0
    %254 = vmatpush1.bf16.msra.mxu0 %v237
    %255 = vmatprep.subr.bf16.mxu0 0
    %256 = vmatpush1.bf16.msra.mxu0 %v238
    %257 = vmatprep.subr.bf16.mxu0 0
    %258 = vmatpush1.bf16.msra.mxu0 %v239
    %259 = vmatprep.subr.bf16.mxu0 0
    %260 = vmatpush1.bf16.msra.mxu0 %v240
    %261 = vmatprep.subr.bf16.mxu0 0
    %262 = vmatpush1.bf16.msra.mxu0 %v241
    %263 = vmatprep.subr.bf16.mxu0 0
    %264 = vmatpush1.bf16.msra.mxu0 %v242
    %265 = vmatprep.subr.bf16.mxu0 0
    %266 = vmatpush1.bf16.msra.mxu0 %v243
    %267 = vmatprep.subr.bf16.mxu0 0
    %268 = vmatpush1.bf16.msra.mxu0 %v244
    %269 = vmatprep.subr.bf16.mxu0 0
    %270 = vmatpush1.bf16.msra.mxu0 0
    %271 = vmatprep.subr.bf16.mxu0 0
    %272 = vmatpush1.bf16.msra.mxu0 0
    %273 = vmatprep.subr.bf16.mxu0 0
    %274 = vmatpush1.bf16.msra.mxu0 0
    %275 = vmatprep.subr.bf16.mxu0 0
    %276 = vmatpush1.bf16.msra.mxu0 0
    %277 = vmatprep.subr.bf16.mxu0 0
    %278 = vmatpush1.bf16.msra.mxu0 0
    %279 = vmatprep.subr.bf16.mxu0 0
    %280 = vmatpush1.bf16.msra.mxu0 0
    %281 = vmatprep.subr.bf16.mxu0 0
    %282 = vmatpush1.bf16.msra.mxu0 0
    %283 = vmatprep.subr.bf16.mxu0 0
    %284 = vmatpush1.bf16.msra.mxu0 0
    %285 = vmatprep.mubr.bf16.mxu0 0
    %286 = vmatmul.mubr.bf16.gmra.mrb[0].mxu0 %v181
    %v287 = vpop.f32.mrb[0].mxu0
    %v288 = vadd.f32 %v203, %v287
    %v289 = vpop.f32.mrb[0].mxu0
    %v290 = vpop.f32.mrb[0].mxu0
    %v291 = vadd.f32 %v203, %v290
    %v292 = vpop.f32.mrb[0].mxu0
    %293 = vdwg.mxu0
    %v294 = vmax.f32 %v288, 0.0
    %v295 = vmax.f32 %v291, 0.0
    %v296 = vpack.c.bf16 %v295, %v294
    %v297 = vld [vmem:[#allocation8] sm:$0xf]
    %v298 = vld [vmem:[#allocation8 + $0x4] sm:$0xf]
    %v299 = vld [vmem:[#allocation8 + $0x8] sm:$0xf]
    %v300 = vld [vmem:[#allocation8 + $0xc] sm:$0xf]
    %v301 = vld [vmem:[#allocation8 + $0x10] sm:$0xf]
    %v302 = vld [vmem:[#allocation8 + $0x14] sm:$0xf]
    %v303 = vld [vmem:[#allocation8 + $0x18] sm:$0xf]
    %v304 = vld [vmem:[#allocation8 + $0x1c] sm:$0xf]
    %v305 = vld [vmem:[#allocation8 + $0x20] sm:$0xf]
    %v306 = vld [vmem:[#allocation8 + $0x24] sm:$0xf]
    %v307 = vld [vmem:[#allocation8 + $0x28] sm:$0xf]
    %v308 = vld [vmem:[#allocation8 + $0x2c] sm:$0xf]
    %v309 = vld [vmem:[#allocation8 + $0x30] sm:$0xf]
    %v310 = vld [vmem:[#allocation8 + $0x34] sm:$0xf]
    %v311 = vld [vmem:[#allocation8 + $0x38] sm:$0xf]
    %v312 = vld [vmem:[#allocation8 + $0x3c] sm:$0xf]
    %v313 = vld [vmem:[#allocation10] sm:$0x1]
    %v315 = vlaneseq
    %v316 = vshrl.u32 %v315, 7
    %v317 = vsub.s32 0, %v316
    %v318 = vrot.slane %v313, %v317
    %v336 = vunpack.c.l.b16 %v297
    %v337 = vunpack.c.l.b16 %v298
    %v338 = vunpack.c.l.b16 %v299
    %v339 = vunpack.c.l.b16 %v300
    %v340 = vunpack.c.l.b16 %v301
    %v341 = vunpack.c.l.b16 %v302
    %v342 = vunpack.c.l.b16 %v303
    %v343 = vunpack.c.l.b16 %v304
    %v344 = vunpack.c.l.b16 %v305
    %v345 = vunpack.c.l.b16 %v306
    %v346 = vunpack.c.l.b16 %v307
    %v347 = vunpack.c.l.b16 %v308
    %v348 = vunpack.c.l.b16 %v309
    %v349 = vunpack.c.l.b16 %v310
    %v350 = vunpack.c.l.b16 %v311
    %v351 = vunpack.c.l.b16 %v312
    %v352 = vpack.c.b16 %v337, %v336
    %v353 = vpack.c.b16 %v339, %v338
    %v354 = vpack.c.b16 %v341, %v340
    %v355 = vpack.c.b16 %v343, %v342
    %v356 = vpack.c.b16 %v345, %v344
    %v357 = vpack.c.b16 %v347, %v346
    %v358 = vpack.c.b16 %v349, %v348
    %v359 = vpack.c.b16 %v351, %v350
    %368 = vmatprep.subr.bf16.mxu0 0
    %369 = vmatpush1.bf16.msra.mxu0 %v352
    %370 = vmatprep.subr.bf16.mxu0 0
    %371 = vmatpush1.bf16.msra.mxu0 %v353
    %372 = vmatprep.subr.bf16.mxu0 0
    %373 = vmatpush1.bf16.msra.mxu0 %v354
    %374 = vmatprep.subr.bf16.mxu0 0
    %375 = vmatpush1.bf16.msra.mxu0 %v355
    %376 = vmatprep.subr.bf16.mxu0 0
    %377 = vmatpush1.bf16.msra.mxu0 %v356
    %378 = vmatprep.subr.bf16.mxu0 0
    %379 = vmatpush1.bf16.msra.mxu0 %v357
    %380 = vmatprep.subr.bf16.mxu0 0
    %381 = vmatpush1.bf16.msra.mxu0 %v358
    %382 = vmatprep.subr.bf16.mxu0 0
    %383 = vmatpush1.bf16.msra.mxu0 %v359
    %384 = vmatprep.subr.bf16.mxu0 0
    %385 = vmatpush1.bf16.msra.mxu0 0
    %386 = vmatprep.subr.bf16.mxu0 0
    %387 = vmatpush1.bf16.msra.mxu0 0
    %388 = vmatprep.subr.bf16.mxu0 0
    %389 = vmatpush1.bf16.msra.mxu0 0
    %390 = vmatprep.subr.bf16.mxu0 0
    %391 = vmatpush1.bf16.msra.mxu0 0
    %392 = vmatprep.subr.bf16.mxu0 0
    %393 = vmatpush1.bf16.msra.mxu0 0
    %394 = vmatprep.subr.bf16.mxu0 0
    %395 = vmatpush1.bf16.msra.mxu0 0
    %396 = vmatprep.subr.bf16.mxu0 0
    %397 = vmatpush1.bf16.msra.mxu0 0
    %398 = vmatprep.subr.bf16.mxu0 0
    %399 = vmatpush1.bf16.msra.mxu0 0
    %400 = vmatprep.mubr.bf16.mxu0 0
    %401 = vmatmul.mubr.bf16.gmra.mrb[0].mxu0 %v296
    %v402 = vpop.f32.mrb[0].mxu0
    %v403 = vadd.f32 %v318, %v402
    %v404 = vpop.f32.mrb[0].mxu0
    %v405 = vpop.f32.mrb[0].mxu0
    %v406 = vadd.f32 %v318, %v405
    %v407 = vpop.f32.mrb[0].mxu0
    %408 = vdwg.mxu0
    %v409 = vmax.f32 %v403, 0.0
    %v410 = vmax.f32 %v406, 0.0
    %v411 = vpack.c.bf16 %v410, %v409
    %v412 = vld [vmem:[#allocation11] sm:$0xff]
    %v413 = vld [vmem:[#allocation11 + $0x8] sm:$0xff]
    %v414 = vld [vmem:[#allocation11 + $0x10] sm:$0xff]
    %v415 = vld [vmem:[#allocation11 + $0x18] sm:$0xff]
    %v416 = vld [vmem:[#allocation11 + $0x20] sm:$0xff]
    %v417 = vld [vmem:[#allocation11 + $0x28] sm:$0xff]
    %v418 = vld [vmem:[#allocation11 + $0x30] sm:$0xff]
    %v419 = vld [vmem:[#allocation11 + $0x38] sm:$0xff]
    %v420 = vld [vmem:[#allocation11 + $0x40] sm:$0xff]
    %v421 = vld [vmem:[#allocation11 + $0x48] sm:$0xff]
    %v422 = vld [vmem:[#allocation11 + $0x50] sm:$0xff]
    %v423 = vld [vmem:[#allocation11 + $0x58] sm:$0xff]
    %v424 = vld [vmem:[#allocation11 + $0x60] sm:$0xff]
    %v425 = vld [vmem:[#allocation11 + $0x68] sm:$0xff]
    %v426 = vld [vmem:[#allocation11 + $0x70] sm:$0xff]
    %v427 = vld [vmem:[#allocation11 + $0x78] sm:$0xff]
    %v428 = vld [vmem:[#allocation13] sm:$0x3]
    %v430 = vlaneseq
    %v431 = vshrl.u32 %v430, 7
    %v432 = vsub.s32 0, %v431
    %v433 = vrot.slane %v428, %v432
    %v434 = vlaneseq
    %v435 = vshrl.u32 %v434, 7
    %v436 = vsub.s32 1, %v435
    %v437 = vrot.slane %v428, %v436
    %v456 = vunpack.c.l.b16 %v412
    %v457 = vunpack.c.h.b16 %v412
    %v458 = vunpack.c.l.b16 %v413
    %v459 = vunpack.c.h.b16 %v413
    %v460 = vunpack.c.l.b16 %v414
    %v461 = vunpack.c.h.b16 %v414
    %v462 = vunpack.c.l.b16 %v415
    %v463 = vunpack.c.h.b16 %v415
    %v464 = vunpack.c.l.b16 %v416
    %v465 = vunpack.c.h.b16 %v416
    %v466 = vunpack.c.l.b16 %v417
    %v467 = vunpack.c.h.b16 %v417
    %v468 = vunpack.c.l.b16 %v418
    %v469 = vunpack.c.h.b16 %v418
    %v470 = vunpack.c.l.b16 %v419
    %v471 = vunpack.c.h.b16 %v419
    %v472 = vunpack.c.l.b16 %v420
    %v473 = vunpack.c.h.b16 %v420
    %v474 = vunpack.c.l.b16 %v421
    %v475 = vunpack.c.h.b16 %v421
    %v476 = vunpack.c.l.b16 %v422
    %v477 = vunpack.c.h.b16 %v422
    %v478 = vunpack.c.l.b16 %v423
    %v479 = vunpack.c.h.b16 %v423
    %v480 = vunpack.c.l.b16 %v424
    %v481 = vunpack.c.h.b16 %v424
    %v482 = vunpack.c.l.b16 %v425
    %v483 = vunpack.c.h.b16 %v425
    %v484 = vunpack.c.l.b16 %v426
    %v485 = vunpack.c.h.b16 %v426
    %v486 = vunpack.c.l.b16 %v427
    %v487 = vunpack.c.h.b16 %v427
    %v488 = vpack.c.b16 %v458, %v456
    %v489 = vpack.c.b16 %v459, %v457
    %v490 = vpack.c.b16 %v462, %v460
    %v491 = vpack.c.b16 %v463, %v461
    %v492 = vpack.c.b16 %v466, %v464
    %v493 = vpack.c.b16 %v467, %v465
    %v494 = vpack.c.b16 %v470, %v468
    %v495 = vpack.c.b16 %v471, %v469
    %v496 = vpack.c.b16 %v474, %v472
    %v497 = vpack.c.b16 %v475, %v473
    %v498 = vpack.c.b16 %v478, %v476
    %v499 = vpack.c.b16 %v479, %v477
    %v500 = vpack.c.b16 %v482, %v480
    %v501 = vpack.c.b16 %v483, %v481
    %v502 = vpack.c.b16 %v486, %v484
    %v503 = vpack.c.b16 %v487, %v485
    %520 = vmatprep.subr.bf16.mxu0 %v489
    %521 = vmatpush1.bf16.msra.mxu0 %v488
    %522 = vmatprep.subr.bf16.mxu0 %v491
    %523 = vmatpush1.bf16.msra.mxu0 %v490
    %524 = vmatprep.subr.bf16.mxu0 %v493
    %525 = vmatpush1.bf16.msra.mxu0 %v492
    %526 = vmatprep.subr.bf16.mxu0 %v495
    %527 = vmatpush1.bf16.msra.mxu0 %v494
    %528 = vmatprep.subr.bf16.mxu0 %v497
    %529 = vmatpush1.bf16.msra.mxu0 %v496
    %530 = vmatprep.subr.bf16.mxu0 %v499
    %531 = vmatpush1.bf16.msra.mxu0 %v498
    %532 = vmatprep.subr.bf16.mxu0 %v501
    %533 = vmatpush1.bf16.msra.mxu0 %v500
    %534 = vmatprep.subr.bf16.mxu0 %v503
    %535 = vmatpush1.bf16.msra.mxu0 %v502
    %536 = vmatprep.subr.bf16.mxu0 0
    %537 = vmatpush1.bf16.msra.mxu0 0
    %538 = vmatprep.subr.bf16.mxu0 0
    %539 = vmatpush1.bf16.msra.mxu0 0
    %540 = vmatprep.subr.bf16.mxu0 0
    %541 = vmatpush1.bf16.msra.mxu0 0
    %542 = vmatprep.subr.bf16.mxu0 0
    %543 = vmatpush1.bf16.msra.mxu0 0
    %544 = vmatprep.subr.bf16.mxu0 0
    %545 = vmatpush1.bf16.msra.mxu0 0
    %546 = vmatprep.subr.bf16.mxu0 0
    %547 = vmatpush1.bf16.msra.mxu0 0
    %548 = vmatprep.subr.bf16.mxu0 0
    %549 = vmatpush1.bf16.msra.mxu0 0
    %550 = vmatprep.subr.bf16.mxu0 0
    %551 = vmatpush1.bf16.msra.mxu0 0
    %552 = vmatprep.mubr.bf16.mxu0 0
    %553 = vmatmul.mubr.bf16.gmra.mrb[0].mxu0 %v411
    %v554 = vpop.f32.mrb[0].mxu0
    %v555 = vadd.f32 %v433, %v554
    %v556 = vpop.f32.mrb[0].mxu0
    %v557 = vadd.f32 %v437, %v556
    %v558 = vpop.f32.mrb[0].mxu0
    %v559 = vadd.f32 %v433, %v558
    %v560 = vpop.f32.mrb[0].mxu0
    %v561 = vadd.f32 %v437, %v560
    %562 = vdwg.mxu0
    %v563 = vmax.f32 %v555, 0.0
    %v564 = vmax.f32 %v557, 0.0
    %v565 = vmax.f32 %v559, 0.0
    %v566 = vmax.f32 %v561, 0.0
    %v567 = vpack.c.bf16 %v565, %v563
    %v568 = vpack.c.bf16 %v566, %v564
    %v569 = vld [vmem:[#allocation14] sm:$0xf]
    %v570 = vld [vmem:[#allocation14 + $0x4] sm:$0xf]
    %v571 = vld [vmem:[#allocation14 + $0x8] sm:$0xf]
    %v572 = vld [vmem:[#allocation14 + $0xc] sm:$0xf]
    %v573 = vld [vmem:[#allocation14 + $0x10] sm:$0xf]
    %v574 = vld [vmem:[#allocation14 + $0x14] sm:$0xf]
    %v575 = vld [vmem:[#allocation14 + $0x18] sm:$0xf]
    %v576 = vld [vmem:[#allocation14 + $0x1c] sm:$0xf]
    %v577 = vld [vmem:[#allocation14 + $0x20] sm:$0xf]
    %v578 = vld [vmem:[#allocation14 + $0x24] sm:$0xf]
    %v579 = vld [vmem:[#allocation14 + $0x28] sm:$0xf]
    %v580 = vld [vmem:[#allocation14 + $0x2c] sm:$0xf]
    %v581 = vld [vmem:[#allocation14 + $0x30] sm:$0xf]
    %v582 = vld [vmem:[#allocation14 + $0x34] sm:$0xf]
    %v583 = vld [vmem:[#allocation14 + $0x38] sm:$0xf]
    %v584 = vld [vmem:[#allocation14 + $0x3c] sm:$0xf]
    %v585 = vld [vmem:[#allocation14 + $0x40] sm:$0xf]
    %v586 = vld [vmem:[#allocation14 + $0x44] sm:$0xf]
    %v587 = vld [vmem:[#allocation14 + $0x48] sm:$0xf]
    %v588 = vld [vmem:[#allocation14 + $0x4c] sm:$0xf]
    %v589 = vld [vmem:[#allocation14 + $0x50] sm:$0xf]
    %v590 = vld [vmem:[#allocation14 + $0x54] sm:$0xf]
    %v591 = vld [vmem:[#allocation14 + $0x58] sm:$0xf]
    %v592 = vld [vmem:[#allocation14 + $0x5c] sm:$0xf]
    %v593 = vld [vmem:[#allocation14 + $0x60] sm:$0xf]
    %v594 = vld [vmem:[#allocation14 + $0x64] sm:$0xf]
    %v595 = vld [vmem:[#allocation14 + $0x68] sm:$0xf]
    %v596 = vld [vmem:[#allocation14 + $0x6c] sm:$0xf]
    %v597 = vld [vmem:[#allocation14 + $0x70] sm:$0xf]
    %v598 = vld [vmem:[#allocation14 + $0x74] sm:$0xf]
    %v599 = vld [vmem:[#allocation14 + $0x78] sm:$0xf]
    %v600 = vld [vmem:[#allocation14 + $0x7c] sm:$0xf]
    %v601 = vld [vmem:[#allocation16] sm:$0x1]
    %v603 = vlaneseq
    %v604 = vshrl.u32 %v603, 7
    %v605 = vsub.s32 0, %v604
    %v606 = vrot.slane %v601, %v605
    %v640 = vunpack.c.l.b16 %v569
    %v641 = vunpack.c.l.b16 %v570
    %v642 = vunpack.c.l.b16 %v571
    %v643 = vunpack.c.l.b16 %v572
    %v644 = vunpack.c.l.b16 %v573
    %v645 = vunpack.c.l.b16 %v574
    %v646 = vunpack.c.l.b16 %v575
    %v647 = vunpack.c.l.b16 %v576
    %v648 = vunpack.c.l.b16 %v577
    %v649 = vunpack.c.l.b16 %v578
    %v650 = vunpack.c.l.b16 %v579
    %v651 = vunpack.c.l.b16 %v580
    %v652 = vunpack.c.l.b16 %v581
    %v653 = vunpack.c.l.b16 %v582
    %v654 = vunpack.c.l.b16 %v583
    %v655 = vunpack.c.l.b16 %v584
    %v656 = vunpack.c.l.b16 %v585
    %v657 = vunpack.c.l.b16 %v586
    %v658 = vunpack.c.l.b16 %v587
    %v659 = vunpack.c.l.b16 %v588
    %v660 = vunpack.c.l.b16 %v589
    %v661 = vunpack.c.l.b16 %v590
    %v662 = vunpack.c.l.b16 %v591
    %v663 = vunpack.c.l.b16 %v592
    %v664 = vunpack.c.l.b16 %v593
    %v665 = vunpack.c.l.b16 %v594
    %v666 = vunpack.c.l.b16 %v595
    %v667 = vunpack.c.l.b16 %v596
    %v668 = vunpack.c.l.b16 %v597
    %v669 = vunpack.c.l.b16 %v598
    %v670 = vunpack.c.l.b16 %v599
    %v671 = vunpack.c.l.b16 %v600
    %v672 = vpack.c.b16 %v641, %v640
    %v673 = vpack.c.b16 %v643, %v642
    %v674 = vpack.c.b16 %v645, %v644
    %v675 = vpack.c.b16 %v647, %v646
    %v676 = vpack.c.b16 %v649, %v648
    %v677 = vpack.c.b16 %v651, %v650
    %v678 = vpack.c.b16 %v653, %v652
    %v679 = vpack.c.b16 %v655, %v654
    %v680 = vpack.c.b16 %v657, %v656
    %v681 = vpack.c.b16 %v659, %v658
    %v682 = vpack.c.b16 %v661, %v660
    %v683 = vpack.c.b16 %v663, %v662
    %v684 = vpack.c.b16 %v665, %v664
    %v685 = vpack.c.b16 %v667, %v666
    %v686 = vpack.c.b16 %v669, %v668
    %v687 = vpack.c.b16 %v671, %v670
    %704 = vmatprep.subr.bf16.mxu0 0
    %705 = vmatpush1.bf16.msra.mxu0 %v672
    %706 = vmatprep.subr.bf16.mxu0 0
    %707 = vmatpush1.bf16.msra.mxu0 %v673
    %708 = vmatprep.subr.bf16.mxu0 0
    %709 = vmatpush1.bf16.msra.mxu0 %v674
    %710 = vmatprep.subr.bf16.mxu0 0
    %711 = vmatpush1.bf16.msra.mxu0 %v675
    %712 = vmatprep.subr.bf16.mxu0 0
    %713 = vmatpush1.bf16.msra.mxu0 %v676
    %714 = vmatprep.subr.bf16.mxu0 0
    %715 = vmatpush1.bf16.msra.mxu0 %v677
    %716 = vmatprep.subr.bf16.mxu0 0
    %717 = vmatpush1.bf16.msra.mxu0 %v678
    %718 = vmatprep.subr.bf16.mxu0 0
    %719 = vmatpush1.bf16.msra.mxu0 %v679
    %720 = vmatprep.subr.bf16.mxu0 0
    %721 = vmatpush1.bf16.msra.mxu0 %v680
    %722 = vmatprep.subr.bf16.mxu0 0
    %723 = vmatpush1.bf16.msra.mxu0 %v681
    %724 = vmatprep.subr.bf16.mxu0 0
    %725 = vmatpush1.bf16.msra.mxu0 %v682
    %726 = vmatprep.subr.bf16.mxu0 0
    %727 = vmatpush1.bf16.msra.mxu0 %v683
    %728 = vmatprep.subr.bf16.mxu0 0
    %729 = vmatpush1.bf16.msra.mxu0 %v684
    %730 = vmatprep.subr.bf16.mxu0 0
    %731 = vmatpush1.bf16.msra.mxu0 %v685
    %732 = vmatprep.subr.bf16.mxu0 0
    %733 = vmatpush1.bf16.msra.mxu0 %v686
    %734 = vmatprep.subr.bf16.mxu0 0
    %735 = vmatpush1.bf16.msra.mxu0 %v687
    %736 = vmatprep.mubr.bf16.mxu0 %v568
    %737 = vmatmul.mubr.bf16.gmra.mrb[0].mxu0 %v567
    %v738 = vpop.f32.mrb[0].mxu0
    %v739 = vadd.f32 %v606, %v738
    %v740 = vpop.f32.mrb[0].mxu0
    %v741 = vpop.f32.mrb[0].mxu0
    %v742 = vadd.f32 %v606, %v741
    %v743 = vpop.f32.mrb[0].mxu0
    %744 = vdwg.mxu0
    %v745 = vmax.f32 %v739, 0.0
    %v746 = vmax.f32 %v742, 0.0
    %v747 = vpack.c.bf16 %v746, %v745
    %v748 = vld [vmem:[#allocation17] sm:$0xf]
    %v749 = vld [vmem:[#allocation17 + $0x4] sm:$0xf]
    %v750 = vld [vmem:[#allocation17 + $0x8] sm:$0xf]
    %v751 = vld [vmem:[#allocation17 + $0xc] sm:$0xf]
    %v752 = vld [vmem:[#allocation17 + $0x10] sm:$0xf]
    %v753 = vld [vmem:[#allocation17 + $0x14] sm:$0xf]
    %v754 = vld [vmem:[#allocation17 + $0x18] sm:$0xf]
    %v755 = vld [vmem:[#allocation17 + $0x1c] sm:$0xf]
    %v756 = vld [vmem:[#allocation17 + $0x20] sm:$0xf]
    %v757 = vld [vmem:[#allocation17 + $0x24] sm:$0xf]
    %v758 = vld [vmem:[#allocation17 + $0x28] sm:$0xf]
    %v759 = vld [vmem:[#allocation17 + $0x2c] sm:$0xf]
    %v760 = vld [vmem:[#allocation17 + $0x30] sm:$0xf]
    %v761 = vld [vmem:[#allocation17 + $0x34] sm:$0xf]
    %v762 = vld [vmem:[#allocation17 + $0x38] sm:$0xf]
    %v763 = vld [vmem:[#allocation17 + $0x3c] sm:$0xf]
    %v764 = vld [vmem:[#allocation19] sm:$0x1]
    %v766 = vlaneseq
    %v767 = vshrl.u32 %v766, 7
    %v768 = vsub.s32 0, %v767
    %v769 = vrot.slane %v764, %v768
    %v787 = vunpack.c.l.b16 %v748
    %v788 = vunpack.c.l.b16 %v749
    %v789 = vunpack.c.l.b16 %v750
    %v790 = vunpack.c.l.b16 %v751
    %v791 = vunpack.c.l.b16 %v752
    %v792 = vunpack.c.l.b16 %v753
    %v793 = vunpack.c.l.b16 %v754
    %v794 = vunpack.c.l.b16 %v755
    %v795 = vunpack.c.l.b16 %v756
    %v796 = vunpack.c.l.b16 %v757
    %v797 = vunpack.c.l.b16 %v758
    %v798 = vunpack.c.l.b16 %v759
    %v799 = vunpack.c.l.b16 %v760
    %v800 = vunpack.c.l.b16 %v761
    %v801 = vunpack.c.l.b16 %v762
    %v802 = vunpack.c.l.b16 %v763
    %v803 = vpack.c.b16 %v788, %v787
    %v804 = vpack.c.b16 %v790, %v789
    %v805 = vpack.c.b16 %v792, %v791
    %v806 = vpack.c.b16 %v794, %v793
    %v807 = vpack.c.b16 %v796, %v795
    %v808 = vpack.c.b16 %v798, %v797
    %v809 = vpack.c.b16 %v800, %v799
    %v810 = vpack.c.b16 %v802, %v801
    %819 = vmatprep.subr.bf16.mxu0 0
    %820 = vmatpush1.bf16.msra.mxu0 %v803
    %821 = vmatprep.subr.bf16.mxu0 0
    %822 = vmatpush1.bf16.msra.mxu0 %v804
    %823 = vmatprep.subr.bf16.mxu0 0
    %824 = vmatpush1.bf16.msra.mxu0 %v805
    %825 = vmatprep.subr.bf16.mxu0 0
    %826 = vmatpush1.bf16.msra.mxu0 %v806
    %827 = vmatprep.subr.bf16.mxu0 0
    %828 = vmatpush1.bf16.msra.mxu0 %v807
    %829 = vmatprep.subr.bf16.mxu0 0
    %830 = vmatpush1.bf16.msra.mxu0 %v808
    %831 = vmatprep.subr.bf16.mxu0 0
    %832 = vmatpush1.bf16.msra.mxu0 %v809
    %833 = vmatprep.subr.bf16.mxu0 0
    %834 = vmatpush1.bf16.msra.mxu0 %v810
    %835 = vmatprep.subr.bf16.mxu0 0
    %836 = vmatpush1.bf16.msra.mxu0 0
    %837 = vmatprep.subr.bf16.mxu0 0
    %838 = vmatpush1.bf16.msra.mxu0 0
    %839 = vmatprep.subr.bf16.mxu0 0
    %840 = vmatpush1.bf16.msra.mxu0 0
    %841 = vmatprep.subr.bf16.mxu0 0
    %842 = vmatpush1.bf16.msra.mxu0 0
    %843 = vmatprep.subr.bf16.mxu0 0
    %844 = vmatpush1.bf16.msra.mxu0 0
    %845 = vmatprep.subr.bf16.mxu0 0
    %846 = vmatpush1.bf16.msra.mxu0 0
    %847 = vmatprep.subr.bf16.mxu0 0
    %848 = vmatpush1.bf16.msra.mxu0 0
    %849 = vmatprep.subr.bf16.mxu0 0
    %850 = vmatpush1.bf16.msra.mxu0 0
    %851 = vmatprep.mubr.bf16.mxu0 0
    %852 = vmatmul.mubr.bf16.gmra.mrb[0].mxu0 %v747
    %v853 = vpop.f32.mrb[0].mxu0
    %v854 = vadd.f32 %v769, %v853
    %v855 = vpop.f32.mrb[0].mxu0
    %v856 = vpop.f32.mrb[0].mxu0
    %v857 = vadd.f32 %v769, %v856
    %v858 = vpop.f32.mrb[0].mxu0
    %859 = vdwg.mxu0
    %860 = vst [vmem:[#allocation20] sm:$0xff] %v854
    %861 = vst [vmem:[#allocation20 + $0x8] sm:$0xff] %v857
    // Predicated region
    $region90: #{simplenet_forward.1} parent=1 // pred_check
      _
    $region91: #{simplenet_forward.1} parent=1 // pred_check_branch
      %863 = sbr.rel (0) target = $region93
    $region92: #{simplenet_forward.1} parent=1 // pred_region
      %s865 = ssub.s32 256, 256
      %866 = vsyncadd [#allocation4], %s865
      %s867 = sshll.u32 [#allocation20], 4
      %s868 = int_to_ptr.vmem [resolvable:$true] %s867
      %873 = dma.vmem_to_hbm [thread:$0]  %s868, 256, %s11, [#allocation4], 128, 128, 8
    $region93: #{simplenet_forward.1} parent=1 // pred_fallthru
      _
    // Predicated region
    $region94: #{simplenet_forward.1} parent=1 // pred_check
      _
    $region95: #{simplenet_forward.1} parent=1 // pred_check_branch
      %875 = sbr.rel (0) target = $region97
    $region96: #{simplenet_forward.1} parent=1 // pred_region
      %876 = dma.done [#allocation4], 256
    $region97: #{simplenet_forward.1} parent=1 // pred_fallthru
      _
    %877 = vsyncpa [#allocation3], 1
    %878 = vsyncpa [#allocation6], 1
    %879 = vsyncpa [#allocation9], 1
    %880 = vsyncpa [#allocation12], 1
    %881 = vsyncpa [#allocation15], 1
    %882 = vsyncpa [#allocation18], 1
    %883 = vsyncpa [#allocation4], 1

</llo_original>
